<compile_context>
chip_gen: v7x
topology: tpu7x:2x2x1
jax: 0.10.0
libtpu: 0.0.40
codegen_flags: <defaults>
</compile_context>

<pallas_src>
import numpy as np
import jax
import jax.numpy as jnp
from jax.experimental import pallas as pl
from jax.experimental.pallas import tpu as pltpu


# ----------------------------------------------------------------------------
# host-side glue (runs ONCE at model build time, not per forward call)
# ----------------------------------------------------------------------------
def _round_up(x: int, m: int) -> int:
    return (x + m - 1) // m * m


def _dft_matrices(head_dim: int):
    """Real matrices implementing rfft / irfft (torch default norm='backward')."""
    n = np.arange(head_dim)
    kf = np.arange(head_dim // 2 + 1)
    ang = 2.0 * np.pi * np.outer(n, kf) / head_dim          # (Hd, K)
    FR = np.cos(ang)                                        # rfft real part:  qr = q @ FR
    FI = -np.sin(ang)                                       # rfft imag part:  qi = q @ FI
    w = np.full(kf.shape, 2.0)                              # irfft bin weights
    w[0] = 1.0
    if head_dim % 2 == 0:
        w[-1] = 1.0                                         # Nyquist bin
    GR = (w[:, None] / head_dim) * np.cos(ang.T)            # x = Xr @ GR + Xi @ GI
    GI = -(w[:, None] / head_dim) * np.sin(ang.T)
    return FR, FI, GR, GI


def _prepare_operands(params, dim: int, num_heads: int):
    """Fold rfft/irfft + biases into the projection weights; pad lanes to 128.

    Weights in `params` are stored (in_features, out_features); PyTorch nn.Linear
    stores (out, in) and computes x @ W.T + b — same math.
    """
    hd = dim // num_heads
    K = hd // 2 + 1
    F = num_heads * K
    # Fp: per-segment lane width, 128-aligned so in-kernel slices are free.
    # (Total padding cannot go below next-128 multiple while keeping 128-aligned
    #  segment boundaries, so this packing is already minimal for this layout.)
    Fp = max(128, _round_up(F, 128))

    FR, FI, GR, GI = _dft_matrices(hd)
    eye = np.eye(num_heads)
    FRb = np.kron(eye, FR)                                  # (D, F)  block-diag per head
    FIb = np.kron(eye, FI)
    GRb = np.kron(eye, GR)                                  # (F, D)
    GIb = np.kron(eye, GI)

    def pad_cols(m):                                        # (D, F) -> (D, Fp)
        out = np.zeros((dim, Fp), np.float64); out[:, :F] = m; return out

    def pad_vec(v):                                         # (F,) -> (Fp,)
        out = np.zeros((Fp,), np.float64); out[:F] = v; return out

    wq = np.asarray(params["wq"], np.float64); bq = np.asarray(params["bq"], np.float64)
    wk = np.asarray(params["wk"], np.float64); bk = np.asarray(params["bk"], np.float64)
    wv = np.asarray(params["wv"], np.float64); bv = np.asarray(params["bv"], np.float64)
    wo = np.asarray(params["wo"], np.float64); bo = np.asarray(params["bo"], np.float64)

    # One wide projection matrix: columns = [q_fft_re | q_fft_im | k_fft_re | k_fft_im | v]
    w1 = np.concatenate([pad_cols(wq @ FRb), pad_cols(wq @ FIb),
                         pad_cols(wk @ FRb), pad_cols(wk @ FIb), wv], axis=1)
    b1 = np.concatenate([pad_vec(bq @ FRb), pad_vec(bq @ FIb),
                         pad_vec(bk @ FRb), pad_vec(bk @ FIb), bv])

    # Fused irfft matrix [GR ; GI]: one K=2*Fp matmul instead of two K=Fp matmuls.
    g = np.zeros((2 * Fp, dim), np.float64)
    g[:F, :] = GRb
    g[Fp:Fp + F, :] = GIb

    return {
        "Fp": Fp,
        "w1": jnp.asarray(w1, jnp.bfloat16),                       # (D, 4*Fp + D)
        "b1": jnp.asarray(b1.reshape(1, -1), jnp.float32),         # (1, 4*Fp + D)
        "g":  jnp.asarray(g, jnp.bfloat16),                        # (2*Fp, D)
        "wo": jnp.asarray(wo, jnp.bfloat16),                       # (D, D)
        "bo": jnp.asarray(bo.reshape(1, -1), jnp.float32),         # (1, D)
    }


def _choose_tm(R: int, target: int = 512) -> int:
    """Row-tile size: as large as possible (MXU fill), but keep >= 2 grid steps
    when R allows so both v7x TensorCores get work."""
    tm = min(target, _round_up(R, 8))
    while tm > 128 and pl.cdiv(R, tm) < 2:
        tm //= 2
    return max(8, _round_up(tm, 8))


# ----------------------------------------------------------------------------
# fused Pallas kernel (built once; returns a jitted apply(x) callable)
# ----------------------------------------------------------------------------
def make_fft_self_attention(params, dim: int, num_heads: int, *,
                            tm_target: int = 512, out_dtype=jnp.float32):
    assert dim % num_heads == 0
    ops = _prepare_operands(params, dim, num_heads)       # hoisted: once, not per call
    Fp = ops["Fp"]
    N1 = 4 * Fp + dim

    def kernel(x_ref, w1_ref, b1_ref, g_ref, wo_ref, bo_ref, o_ref):
        xb = x_ref[...].astype(jnp.bfloat16)              # cast in-kernel (x stays f32 in HBM)
        # projections + rfft folded into one long-N matmul (f32 accumulation)
        z = jnp.dot(xb, w1_ref[...], preferred_element_type=jnp.float32) + b1_ref[...]
        qr = z[:, 0 * Fp:1 * Fp]                          # 128-aligned lane slices (free)
        qi = z[:, 1 * Fp:2 * Fp]
        kr = z[:, 2 * Fp:3 * Fp]
        ki = z[:, 3 * Fp:4 * Fp]
        v = z[:, 4 * Fp:]
        # res = q_fft * conj(k_fft)   (elementwise, f32 on the VPU)
        rr = qr * kr + qi * ki
        ri = qi * kr - qr * ki
        # irfft as ONE matmul (K = 2*Fp = 256 fills the 256-deep MXU on v6e/v7x).
        # Both halves are 128-lane aligned -> concat is relayout-free.
        rri = jnp.concatenate([rr.astype(jnp.bfloat16), ri.astype(jnp.bfloat16)], axis=-1)
        attn = jnp.dot(rri, g_ref[...], preferred_element_type=jnp.float32)   # (tm, D)
        out = attn * v
        y = jnp.dot(out.astype(jnp.bfloat16), wo_ref[...],
                    preferred_element_type=jnp.float32) + bo_ref[...]
        o_ref[...] = y.astype(o_ref.dtype)

    @jax.jit
    def apply(x):
        B, S, D = x.shape
        assert D == dim
        R = B * S                                          # whole op is per-row
        tm = _choose_tm(R, tm_target)
        x2d = x.reshape(R, D)                              # no pad, no dtype copy in HBM

        # Constant operands: single-buffered (index_map is constant -> no pipelining
        # needed); keeps weight VMEM flat when D / tm grow (v7x: 64 MiB VMEM).
        const = dict(pipeline_mode=pl.Buffered(1))

        y2d = pl.pallas_call(
            kernel,
            out_shape=jax.ShapeDtypeStruct((R, D), out_dtype),
            grid=(pl.cdiv(R, tm),),                        # partial last tile masked by Pallas
            in_specs=[
                pl.BlockSpec((tm, D), lambda i: (i, 0)),               # x row tile (f32)
                pl.BlockSpec((D, N1), lambda i: (0, 0), **const),      # fused projection weights
                pl.BlockSpec((1, N1), lambda i: (0, 0), **const),      # fused biases
                pl.BlockSpec((2 * Fp, D), lambda i: (0, 0), **const),  # fused irfft [GR; GI]
                pl.BlockSpec((D, D), lambda i: (0, 0), **const),       # out_proj weight
                pl.BlockSpec((1, D), lambda i: (0, 0), **const),       # out_proj bias
            ],
            out_specs=pl.BlockSpec((tm, D), lambda i: (i, 0)),
            compiler_params=pltpu.CompilerParams(
                dimension_semantics=("parallel",)),        # megacore / v7x 2-TC sharding
        )(x2d, ops["w1"], ops["b1"], ops["g"], ops["wo"], ops["bo"])

        return y2d.reshape(B, S, D)

    return apply


# ----------------------------------------------------------------------------
# pure-JAX reference (faithful FFT path, for numerical validation)
# ----------------------------------------------------------------------------
def reference_forward(x, params, num_heads):
    B, S, D = x.shape
    hd = D // num_heads
    q = x @ params["wq"] + params["bq"]
    k = x @ params["wk"] + params["bk"]
    v = x @ params["wv"] + params["bv"]

    def heads(t):
        return jnp.transpose(t.reshape(B, S, num_heads, hd), (0, 2, 1, 3))

    q, k, v = heads(q), heads(k), heads(v)
    qf = jnp.fft.rfft(q, axis=-1)
    kf = jnp.fft.rfft(k, axis=-1)
    attn = jnp.fft.irfft(qf * jnp.conj(kf), n=hd, axis=-1)
    out = attn * v
    out = jnp.transpose(out, (0, 2, 1, 3)).reshape(B, S, D)
    return out @ params["wo"] + params["bo"]


# ----------------------------------------------------------------------------
# main
# ----------------------------------------------------------------------------
if __name__ == "__main__":
    B, S, dim, num_heads = 2, 128, 128, 8      # head_dim = 16

    key = jax.random.PRNGKey(0)
    ks = jax.random.split(key, 9)
    scale = 1.0 / np.sqrt(dim)
    params = {
        "wq": scale * jax.random.normal(ks[0], (dim, dim), jnp.float32),
        "bq": 0.02 * jax.random.normal(ks[1], (dim,), jnp.float32),
        "wk": scale * jax.random.normal(ks[2], (dim, dim), jnp.float32),
        "bk": 0.02 * jax.random.normal(ks[3], (dim,), jnp.float32),
        "wv": scale * jax.random.normal(ks[4], (dim, dim), jnp.float32),
        "bv": 0.02 * jax.random.normal(ks[5], (dim,), jnp.float32),
        "wo": scale * jax.random.normal(ks[6], (dim, dim), jnp.float32),
        "bo": 0.02 * jax.random.normal(ks[7], (dim,), jnp.float32),
    }
    x = jax.random.normal(ks[8], (B, S, dim), jnp.float32)

    fft_attn = make_fft_self_attention(params, dim, num_heads)   # prep hoisted here
    y = jax.block_until_ready(fft_attn(x))
    ref = jax.block_until_ready(reference_forward(x, params, num_heads))

    y_np, ref_np = np.asarray(y), np.asarray(ref)
    assert y_np.shape == (B, S, dim), y_np.shape
    assert np.all(np.isfinite(y_np))
    # bf16 matmul operands (f32 accumulation): check normalized errors with margin.
    # Dominant error source: bf16 cast of FFT-domain products rr/ri before the irfft matmul.
    rel_l2 = np.linalg.norm(y_np - ref_np) / (np.linalg.norm(ref_np) + 1e-8)
    max_rel = np.max(np.abs(y_np - ref_np)) / (np.max(np.abs(ref_np)) + 1e-8)
    assert rel_l2 < 4e-2, ("rel_l2", rel_l2)
    assert max_rel < 6e-2, ("max_rel", max_rel)

    print("KERNEL_OK")
</pallas_src>

<mosaic_0001>
module attributes {stable_mosaic.version = 11 : i64} {
  func.func @kernel(%arg0: i32, %arg1: memref<128x128xf32, #tpu.memory_space<vmem>>, %arg2: memref<128x640xbf16, #tpu.memory_space<vmem>>, %arg3: memref<1x640xf32, #tpu.memory_space<vmem>>, %arg4: memref<256x128xbf16, #tpu.memory_space<vmem>>, %arg5: memref<128x128xbf16, #tpu.memory_space<vmem>>, %arg6: memref<1x128xf32, #tpu.memory_space<vmem>>, %arg7: memref<128x128xf32, #tpu.memory_space<vmem>>) attributes {dimension_semantics = [#tpu.dimension_semantics<parallel>], iteration_bounds = array<i64: 2>, scalar_prefetch = 0 : i64, scratch_operands = 0 : i64, tpu.core_type = #tpu.core_type<tc>, window_params = [{transform_indices = @transform_0, window_bounds = array<i64: 128, 128>}, {pipeline_mode = #tpu.pipeline_mode<synchronous>, transform_indices = @transform_1, window_bounds = array<i64: 128, 640>}, {pipeline_mode = #tpu.pipeline_mode<synchronous>, transform_indices = @transform_2, window_bounds = array<i64: 1, 640>}, {pipeline_mode = #tpu.pipeline_mode<synchronous>, transform_indices = @transform_3, window_bounds = array<i64: 256, 128>}, {pipeline_mode = #tpu.pipeline_mode<synchronous>, transform_indices = @transform_4, window_bounds = array<i64: 128, 128>}, {pipeline_mode = #tpu.pipeline_mode<synchronous>, transform_indices = @transform_5, window_bounds = array<i64: 1, 128>}, {transform_indices = @transform_6, window_bounds = array<i64: 128, 128>}]} {
    %c0 = arith.constant 0 : index
    %c0_0 = arith.constant 0 : index
    %0 = vector.load %arg1[%c0, %c0_0] : memref<128x128xf32, #tpu.memory_space<vmem>>, vector<128x128xf32>
    %1 = arith.truncf %0 : vector<128x128xf32> to vector<128x128xbf16>
    %c0_1 = arith.constant 0 : index
    %c0_2 = arith.constant 0 : index
    %2 = vector.load %arg2[%c0_1, %c0_2] : memref<128x640xbf16, #tpu.memory_space<vmem>>, vector<128x640xbf16>
    %cst = arith.constant dense<0.000000e+00> : vector<128x640xf32>
    %3 = tpu.matmul %1, %2, %cst {dimension_numbers = #tpu.dot_dimension_numbers<[1], [0], [0], [1], [0, 0, 1, 1], [], []>} : vector<128x128xbf16>, vector<128x640xbf16>, vector<128x640xf32> -> vector<128x640xf32>
    %c0_3 = arith.constant 0 : index
    %c0_4 = arith.constant 0 : index
    %4 = vector.load %arg3[%c0_3, %c0_4] : memref<1x640xf32, #tpu.memory_space<vmem>>, vector<1x640xf32>
    %5 = vector.broadcast %4 : vector<1x640xf32> to vector<128x640xf32>
    %6 = arith.addf %3, %5 : vector<128x640xf32>
    %7 = vector.extract_strided_slice %6 {offsets = [0, 0], sizes = [128, 128], strides = [1, 1]} : vector<128x640xf32> to vector<128x128xf32>
    %8 = vector.extract_strided_slice %6 {offsets = [0, 128], sizes = [128, 128], strides = [1, 1]} : vector<128x640xf32> to vector<128x128xf32>
    %9 = vector.extract_strided_slice %6 {offsets = [0, 256], sizes = [128, 128], strides = [1, 1]} : vector<128x640xf32> to vector<128x128xf32>
    %10 = vector.extract_strided_slice %6 {offsets = [0, 384], sizes = [128, 128], strides = [1, 1]} : vector<128x640xf32> to vector<128x128xf32>
    %11 = vector.extract_strided_slice %6 {offsets = [0, 512], sizes = [128, 128], strides = [1, 1]} : vector<128x640xf32> to vector<128x128xf32>
    %12 = arith.mulf %7, %9 : vector<128x128xf32>
    %13 = arith.mulf %8, %10 : vector<128x128xf32>
    %14 = arith.addf %12, %13 : vector<128x128xf32>
    %15 = arith.mulf %8, %9 : vector<128x128xf32>
    %16 = arith.mulf %7, %10 : vector<128x128xf32>
    %17 = arith.subf %15, %16 : vector<128x128xf32>
    %18 = arith.truncf %14 : vector<128x128xf32> to vector<128x128xbf16>
    %19 = arith.truncf %17 : vector<128x128xf32> to vector<128x128xbf16>
    %20 = tpu.concatenate %18, %19 in 1 : vector<128x128xbf16>, vector<128x128xbf16> -> vector<128x256xbf16>
    %c0_5 = arith.constant 0 : index
    %c0_6 = arith.constant 0 : index
    %21 = vector.load %arg4[%c0_5, %c0_6] : memref<256x128xbf16, #tpu.memory_space<vmem>>, vector<256x128xbf16>
    %cst_7 = arith.constant dense<0.000000e+00> : vector<128x128xf32>
    %22 = tpu.matmul %20, %21, %cst_7 {dimension_numbers = #tpu.dot_dimension_numbers<[1], [0], [0], [1], [0, 0, 1, 1], [], []>} : vector<128x256xbf16>, vector<256x128xbf16>, vector<128x128xf32> -> vector<128x128xf32>
    %23 = arith.mulf %22, %11 : vector<128x128xf32>
    %24 = arith.truncf %23 : vector<128x128xf32> to vector<128x128xbf16>
    %c0_8 = arith.constant 0 : index
    %c0_9 = arith.constant 0 : index
    %25 = vector.load %arg5[%c0_8, %c0_9] : memref<128x128xbf16, #tpu.memory_space<vmem>>, vector<128x128xbf16>
    %cst_10 = arith.constant dense<0.000000e+00> : vector<128x128xf32>
    %26 = tpu.matmul %24, %25, %cst_10 {dimension_numbers = #tpu.dot_dimension_numbers<[1], [0], [0], [1], [0, 0, 1, 1], [], []>} : vector<128x128xbf16>, vector<128x128xbf16>, vector<128x128xf32> -> vector<128x128xf32>
    %c0_11 = arith.constant 0 : index
    %c0_12 = arith.constant 0 : index
    %27 = vector.load %arg6[%c0_11, %c0_12] : memref<1x128xf32, #tpu.memory_space<vmem>>, vector<1x128xf32>
    %28 = vector.broadcast %27 : vector<1x128xf32> to vector<128x128xf32>
    %29 = arith.addf %26, %28 : vector<128x128xf32>
    %c0_13 = arith.constant 0 : index
    %c0_14 = arith.constant 0 : index
    %30 = vector.load %arg7[%c0_13, %c0_14] : memref<128x128xf32, #tpu.memory_space<vmem>>, vector<128x128xf32>
    tpu.vector_store %arg7[%c0_13, %c0_14], %29 {strides = array<i32>} : memref<128x128xf32, #tpu.memory_space<vmem>>, vector<128x128xf32>,
    return
  }
  func.func @transform_0(%arg0: i32) -> (i32, i32) {
    %c0_i32 = arith.constant 0 : i32
    %c0_i32_0 = arith.constant 0 : i32
    return %arg0, %c0_i32 : i32, i32
  }
  func.func @transform_1(%arg0: i32) -> (i32, i32) {
    %c0_i32 = arith.constant 0 : i32
    %c0_i32_0 = arith.constant 0 : i32
    %c0_i32_1 = arith.constant 0 : i32
    return %c0_i32, %c0_i32_0 : i32, i32
  }
  func.func @transform_2(%arg0: i32) -> (i32, i32) {
    %c0_i32 = arith.constant 0 : i32
    %c0_i32_0 = arith.constant 0 : i32
    %c0_i32_1 = arith.constant 0 : i32
    return %c0_i32, %c0_i32_0 : i32, i32
  }
  func.func @transform_3(%arg0: i32) -> (i32, i32) {
    %c0_i32 = arith.constant 0 : i32
    %c0_i32_0 = arith.constant 0 : i32
    %c0_i32_1 = arith.constant 0 : i32
    return %c0_i32, %c0_i32_0 : i32, i32
  }
  func.func @transform_4(%arg0: i32) -> (i32, i32) {
    %c0_i32 = arith.constant 0 : i32
    %c0_i32_0 = arith.constant 0 : i32
    %c0_i32_1 = arith.constant 0 : i32
    return %c0_i32, %c0_i32_0 : i32, i32
  }
  func.func @transform_5(%arg0: i32) -> (i32, i32) {
    %c0_i32 = arith.constant 0 : i32
    %c0_i32_0 = arith.constant 0 : i32
    %c0_i32_1 = arith.constant 0 : i32
    return %c0_i32, %c0_i32_0 : i32, i32
  }
  func.func @transform_6(%arg0: i32) -> (i32, i32) {
    %c0_i32 = arith.constant 0 : i32
    %c0_i32_0 = arith.constant 0 : i32
    return %arg0, %c0_i32 : i32, i32
  }
}

</mosaic_0001>

<llo_original>
// kernel: apply.1
$region0: #{apply.1}
  #allocation0 [shape = 'u32[]', space=smem, size = 0x4, offset = 0x4, fixed_abs, tag = 'smem constant byte address 0x4 - core index']
  #allocation1 [shape = 'u32[144,128]{1,0:T(1,128)}', space=vmem, size = 0x12000, scoped, tag = 'internal scratch']
  %s0 = inlined_call_operand.vmem [shape: f32[256,128], index: 0, kind: input, shape index: {}]
  %s1 = inlined_call_operand.vmem [shape: bf16[128,640], index: 1, kind: input, shape index: {}]
  %s2 = inlined_call_operand.vmem [shape: f32[1,640], index: 2, kind: input, shape index: {}]
  %s3 = inlined_call_operand.vmem [shape: bf16[256,128], index: 3, kind: input, shape index: {}]
  %s4 = inlined_call_operand.vmem [shape: bf16[128,128], index: 4, kind: input, shape index: {}]
  %s5 = inlined_call_operand.vmem [shape: f32[1,128], index: 5, kind: input, shape index: {}]
  %s6 = inlined_call_operand.hbm [shape: f32[256,128], index: 6, kind: output, shape index: {}]
  %s7 = sld [smem:[#allocation0]]
  $region57: #{apply.1} parent=0
    _
  %s9 = ssub.s32 1, %s7
  %s10 = scalar_select 0, %s9, %s7
  $region1: #{apply.1} parent=0
    #allocation2 [shape = 'u8[131072]{0}', space=vmem, size = 0x20000, scoped, tag = 'output window, operand 0']
    #allocation3 [shape = 's32[2]{0}', space=sflag, size = 0x8, scoped, tag = 'scoped memory for apply.1']
    %11 = vsyncpa [#allocation3], 0
    %s12 = scalar_lea.sflag [#allocation3], 1
    %13 = vsyncpa %s12, 0
    loop: start=0, step=1, limit=4
    $region2: #{apply.1} parent=1 // loop_pre_header
      _
    $region3: #{apply.1} parent=1 // loop_header
      %s15 = sphi 0, %s19
      %p16 = scmp.ge.s32.totalorder %s15, 4
      %s25 = sphi 0, %s27
      %s28 = sphi 0, %s25
      %s29 = sphi 0, %s28
      %s45 = sphi 0, %s29
      %s49 = sphi 0, %s49
      %s51 = sphi 0, %s49
      %s52 = sphi 0, %s51
      %s66 = sphi 0, %s52
      %s70 = sphi 0, %s70
      %s72 = sphi 0, %s70
      %s73 = sphi 0, %s72
      %s87 = sphi 0, %s73
      %s91 = sphi 0, %s91
      %s93 = sphi 0, %s91
      %s94 = sphi 0, %s93
      %s108 = sphi 0, %s94
      %s112 = sphi 0, %s112
      %s114 = sphi 0, %s112
      %s115 = sphi 0, %s114
      %s129 = sphi 0, %s115
      %s133 = sphi 0, %s133
      %s135 = sphi 0, %s133
      %s136 = sphi 0, %s135
      %s150 = sphi 0, %s136
      %s156 = sphi 0, %s158
      %s159 = sphi 0, %s156
      %s160 = sphi 0, %s159
      %s176 = sphi 0, %s160
    $region4: #{apply.1} parent=1 // loop_header_branch
      %18 = sbr.rel (%p16) target = $region8
    $region5: #{apply.1} parent=1 // loop_body
      %s20 = ssub.s32 %s15, 1
      %s21 = ssub.s32 %s15, 2
      %s22 = sadd.s32 %s15, 1
      %s23 = ssub.s32 %s15, %s22
      %p24 = scmp.eq.s32.totalorder %s23, 0
      %s26 = sadd.s32 %s25, 1
      %s27 = scalar_select %p24, %s25, %s26
      %p30 = pneg %p24
      %p31 = scmp.eq.s32.totalorder %s15, 1
      %p32 = por %p30, %p31
      %p33 = scmp.ne.s32.totalorder %s25, %s28
      %p34 = scmp.eq.s32.totalorder %s15, 0
      %p35 = por %p33, %p34
      %p36 = scmp.ne.s32.totalorder %s25, %s28
      %p37 = scmp.eq.s32.totalorder %s20, 1
      %p38 = por %p36, %p37
      %p39 = scmp.ne.s32.totalorder %s28, %s29
      %p40 = scmp.eq.s32.totalorder %s20, 0
      %p41 = por %p39, %p40
      %p42 = scmp.ne.s32.totalorder %s28, %s29
      %p43 = scmp.eq.s32.totalorder %s21, 1
      %p44 = por %p42, %p43
      %p46 = scmp.ne.s32.totalorder %s29, %s45
      %p47 = scmp.eq.s32.totalorder %s21, 0
      %p48 = por %p46, %p47
      %s50 = sadd.s32 %s49, 1
      %p53 = scmp.eq.s32.totalorder %s15, 1
      %p54 = scmp.ne.s32.totalorder %s49, %s51
      %p55 = scmp.eq.s32.totalorder %s15, 0
      %p56 = por %p54, %p55
      %p57 = scmp.ne.s32.totalorder %s49, %s51
      %p58 = scmp.eq.s32.totalorder %s20, 1
      %p59 = por %p57, %p58
      %p60 = scmp.ne.s32.totalorder %s51, %s52
      %p61 = scmp.eq.s32.totalorder %s20, 0
      %p62 = por %p60, %p61
      %p63 = scmp.ne.s32.totalorder %s51, %s52
      %p64 = scmp.eq.s32.totalorder %s21, 1
      %p65 = por %p63, %p64
      %p67 = scmp.ne.s32.totalorder %s52, %s66
      %p68 = scmp.eq.s32.totalorder %s21, 0
      %p69 = por %p67, %p68
      %s71 = sadd.s32 %s70, 1
      %p74 = scmp.eq.s32.totalorder %s15, 1
      %p75 = scmp.ne.s32.totalorder %s70, %s72
      %p76 = scmp.eq.s32.totalorder %s15, 0
      %p77 = por %p75, %p76
      %p78 = scmp.ne.s32.totalorder %s70, %s72
      %p79 = scmp.eq.s32.totalorder %s20, 1
      %p80 = por %p78, %p79
      %p81 = scmp.ne.s32.totalorder %s72, %s73
      %p82 = scmp.eq.s32.totalorder %s20, 0
      %p83 = por %p81, %p82
      %p84 = scmp.ne.s32.totalorder %s72, %s73
      %p85 = scmp.eq.s32.totalorder %s21, 1
      %p86 = por %p84, %p85
      %p88 = scmp.ne.s32.totalorder %s73, %s87
      %p89 = scmp.eq.s32.totalorder %s21, 0
      %p90 = por %p88, %p89
      %s92 = sadd.s32 %s91, 1
      %p95 = scmp.eq.s32.totalorder %s15, 1
      %p96 = scmp.ne.s32.totalorder %s91, %s93
      %p97 = scmp.eq.s32.totalorder %s15, 0
      %p98 = por %p96, %p97
      %p99 = scmp.ne.s32.totalorder %s91, %s93
      %p100 = scmp.eq.s32.totalorder %s20, 1
      %p101 = por %p99, %p100
      %p102 = scmp.ne.s32.totalorder %s93, %s94
      %p103 = scmp.eq.s32.totalorder %s20, 0
      %p104 = por %p102, %p103
      %p105 = scmp.ne.s32.totalorder %s93, %s94
      %p106 = scmp.eq.s32.totalorder %s21, 1
      %p107 = por %p105, %p106
      %p109 = scmp.ne.s32.totalorder %s94, %s108
      %p110 = scmp.eq.s32.totalorder %s21, 0
      %p111 = por %p109, %p110
      %s113 = sadd.s32 %s112, 1
      %p116 = scmp.eq.s32.totalorder %s15, 1
      %p117 = scmp.ne.s32.totalorder %s112, %s114
      %p118 = scmp.eq.s32.totalorder %s15, 0
      %p119 = por %p117, %p118
      %p120 = scmp.ne.s32.totalorder %s112, %s114
      %p121 = scmp.eq.s32.totalorder %s20, 1
      %p122 = por %p120, %p121
      %p123 = scmp.ne.s32.totalorder %s114, %s115
      %p124 = scmp.eq.s32.totalorder %s20, 0
      %p125 = por %p123, %p124
      %p126 = scmp.ne.s32.totalorder %s114, %s115
      %p127 = scmp.eq.s32.totalorder %s21, 1
      %p128 = por %p126, %p127
      %p130 = scmp.ne.s32.totalorder %s115, %s129
      %p131 = scmp.eq.s32.totalorder %s21, 0
      %p132 = por %p130, %p131
      %s134 = sadd.s32 %s133, 1
      %p137 = scmp.eq.s32.totalorder %s15, 1
      %p138 = scmp.ne.s32.totalorder %s133, %s135
      %p139 = scmp.eq.s32.totalorder %s15, 0
      %p140 = por %p138, %p139
      %p141 = scmp.ne.s32.totalorder %s133, %s135
      %p142 = scmp.eq.s32.totalorder %s20, 1
      %p143 = por %p141, %p142
      %p144 = scmp.ne.s32.totalorder %s135, %s136
      %p145 = scmp.eq.s32.totalorder %s20, 0
      %p146 = por %p144, %p145
      %p147 = scmp.ne.s32.totalorder %s135, %s136
      %p148 = scmp.eq.s32.totalorder %s21, 1
      %p149 = por %p147, %p148
      %p151 = scmp.ne.s32.totalorder %s136, %s150
      %p152 = scmp.eq.s32.totalorder %s21, 0
      %p153 = por %p151, %p152
      %s154 = ssub.s32 %s15, %s22
      %p155 = scmp.eq.s32.totalorder %s154, 0
      %s157 = sadd.s32 %s156, 1
      %s158 = scalar_select %p155, %s156, %s157
      %p161 = pneg %p155
      %p162 = scmp.eq.s32.totalorder %s15, 1
      %p163 = por %p161, %p162
      %p164 = scmp.ne.s32.totalorder %s156, %s159
      %p165 = scmp.eq.s32.totalorder %s15, 0
      %p166 = por %p164, %p165
      %p167 = scmp.ne.s32.totalorder %s156, %s159
      %p168 = scmp.eq.s32.totalorder %s20, 1
      %p169 = por %p167, %p168
      %p170 = scmp.ne.s32.totalorder %s159, %s160
      %p171 = scmp.eq.s32.totalorder %s20, 0
      %p172 = por %p170, %p171
      %p173 = scmp.ne.s32.totalorder %s159, %s160
      %p174 = scmp.eq.s32.totalorder %s21, 1
      %p175 = por %p173, %p174
      %p177 = scmp.ne.s32.totalorder %s160, %s176
      %p178 = scmp.eq.s32.totalorder %s21, 0
      %p179 = por %p177, %p178
      %p180 = scmp.le.s32.totalorder 1, %s15
      %p181 = scmp.lt.s32.totalorder %s15, 3
      %p182 = pnand %p180, %p181
      %p183 = pneg %p182
      // Predicated region
      $region9: #{apply.1} parent=5 // pred_check
        _
      $region10: #{apply.1} parent=5 // pred_check_branch
        %185 = sbr.rel (%p182) target = $region12
      $region11: #{apply.1} parent=5 // pred_region
        %s186 = ssub.s32 %s15, 1
        // Predicated region
        $region13: #{apply.1} parent=11 // pred_check
          %p187 = pneg %p62
        $region14: #{apply.1} parent=11 // pred_check_branch
          %189 = sbr.rel (%p187) target = $region16
        $region15: #{apply.1} parent=11 // pred_region
          _
        $region16: #{apply.1} parent=11 // pred_fallthru
          _
        // Predicated region
        $region17: #{apply.1} parent=11 // pred_check
          %p190 = pneg %p83
        $region18: #{apply.1} parent=11 // pred_check_branch
          %192 = sbr.rel (%p190) target = $region20
        $region19: #{apply.1} parent=11 // pred_region
          _
        $region20: #{apply.1} parent=11 // pred_fallthru
          _
        // Predicated region
        $region21: #{apply.1} parent=11 // pred_check
          %p193 = pneg %p104
        $region22: #{apply.1} parent=11 // pred_check_branch
          %195 = sbr.rel (%p193) target = $region24
        $region23: #{apply.1} parent=11 // pred_region
          _
        $region24: #{apply.1} parent=11 // pred_fallthru
          _
        // Predicated region
        $region25: #{apply.1} parent=11 // pred_check
          %p196 = pneg %p125
        $region26: #{apply.1} parent=11 // pred_check_branch
          %198 = sbr.rel (%p196) target = $region28
        $region27: #{apply.1} parent=11 // pred_region
          _
        $region28: #{apply.1} parent=11 // pred_fallthru
          _
        // Predicated region
        $region29: #{apply.1} parent=11 // pred_check
          %p199 = pneg %p146
        $region30: #{apply.1} parent=11 // pred_check_branch
          %201 = sbr.rel (%p199) target = $region32
        $region31: #{apply.1} parent=11 // pred_region
          _
        $region32: #{apply.1} parent=11 // pred_fallthru
          _
      $region12: #{apply.1} parent=5 // pred_fallthru
        _
      %p202 = scmp.lt.s32.totalorder %s15, 2
      // Predicated region
      $region33: #{apply.1} parent=5 // pred_check
        %p203 = pneg %p202
      $region34: #{apply.1} parent=5 // pred_check_branch
        %205 = sbr.rel (%p203) target = $region36
      $region35: #{apply.1} parent=5 // pred_region
        // Predicated region
        $region37: #{apply.1} parent=35 // pred_check
          %p206 = pneg %p35
        $region38: #{apply.1} parent=35 // pred_check_branch
          %208 = sbr.rel (%p206) target = $region40
        $region39: #{apply.1} parent=35 // pred_region
          %s209 = smul.u32 16, %s15
          %p210 = scmp.lt.s32.totalorder %s209, 31
          %s211 = scalar_select %p210, %s209, 31
          %s212 = smul.addr %s211, 8
          %s213 = scalar_lea.vmem %s0, %s212
          %s214 = smul.u32 16, %s15
        $region40: #{apply.1} parent=35 // pred_fallthru
          _
      $region36: #{apply.1} parent=5 // pred_fallthru
        _
      %p215 = scmp.le.s32.totalorder 1, %s15
      %p216 = scmp.lt.s32.totalorder %s15, 3
      %p217 = pnand %p215, %p216
      %p218 = pneg %p217
      // Predicated region
      $region41: #{apply.1} parent=5 // pred_check
        _
      $region42: #{apply.1} parent=5 // pred_check_branch
        %220 = sbr.rel (%p217) target = $region44
      $region43: #{apply.1} parent=5 // pred_region
        %s221 = ssub.s32 %s15, 1
        %s222 = smul.u32 16, %s20
        %p223 = scmp.lt.s32.totalorder %s222, 31
        %s224 = scalar_select %p223, %s222, 31
        %s225 = smul.addr %s224, 8
        %s226 = scalar_lea.vmem %s0, %s225
        %p227 = pneg %p41
        %p228 = pneg %p38
        %p229 = pneg %p62
        %p230 = pneg %p59
        %p231 = pneg %p83
        %p232 = pneg %p80
        %p233 = pneg %p104
        %p234 = pneg %p101
        %p235 = pneg %p125
        %p236 = pneg %p122
        %p237 = pneg %p146
        %p238 = pneg %p143
        %p239 = pneg %p172
        %p240 = pneg %p169
        %s241 = sand.u32 %s159, 1
        %s242 = scalar_lea.sflag [#allocation3], %s241
        %s243 = sand.u32 %s159, 1
        %s244 = smul.addr %s243, 128
        %s245 = scalar_lea.vmem [#allocation2], %s244
        %s246 = smul.u32 16, %s20
        %p247 = scmp.lt.s32.totalorder %s246, 31
        %s248 = scalar_select %p247, %s246, 31
        %s249 = smul.addr %s248, 8
        %s250 = scalar_lea.vmem %s0, %s249
        %s251 = smul.u32 16, %s20
        %s252 = smul.u32 16, %s20
        %v254 = vld [vmem:[%s250] sm:$0xff]
        %v255 = vld [vmem:[%s250 + $0x8] sm:$0xff]
        %v256 = vld [vmem:[%s250 + $0x10] sm:$0xff]
        %v257 = vld [vmem:[%s250 + $0x18] sm:$0xff]
        %v258 = vld [vmem:[%s250 + $0x20] sm:$0xff]
        %v259 = vld [vmem:[%s250 + $0x28] sm:$0xff]
        %v260 = vld [vmem:[%s250 + $0x30] sm:$0xff]
        %v261 = vld [vmem:[%s250 + $0x38] sm:$0xff]
        %v262 = vld [vmem:[%s250 + $0x40] sm:$0xff]
        %v263 = vld [vmem:[%s250 + $0x48] sm:$0xff]
        %v264 = vld [vmem:[%s250 + $0x50] sm:$0xff]
        %v265 = vld [vmem:[%s250 + $0x58] sm:$0xff]
        %v266 = vld [vmem:[%s250 + $0x60] sm:$0xff]
        %v267 = vld [vmem:[%s250 + $0x68] sm:$0xff]
        %v268 = vld [vmem:[%s250 + $0x70] sm:$0xff]
        %v269 = vld [vmem:[%s250 + $0x78] sm:$0xff]
        %v270 = vpack.c.bf16 %v255, %v254
        %v271 = vpack.c.bf16 %v257, %v256
        %v272 = vpack.c.bf16 %v259, %v258
        %v273 = vpack.c.bf16 %v261, %v260
        %v274 = vpack.c.bf16 %v263, %v262
        %v275 = vpack.c.bf16 %v265, %v264
        %v276 = vpack.c.bf16 %v267, %v266
        %v277 = vpack.c.bf16 %v269, %v268
        %v278 = vld [vmem:[%s1] sm:$0xff]
        %v279 = vld [vmem:[%s1 + $0x8] sm:$0xff]
        %v280 = vld [vmem:[%s1 + $0x10] sm:$0xf]
        %v281 = vld [vmem:[%s1 + $0x14] sm:$0xff]
        %v282 = vld [vmem:[%s1 + $0x1c] sm:$0xff]
        %v283 = vld [vmem:[%s1 + $0x24] sm:$0xf]
        %v284 = vld [vmem:[%s1 + $0x28] sm:$0xff]
        %v285 = vld [vmem:[%s1 + $0x30] sm:$0xff]
        %v286 = vld [vmem:[%s1 + $0x38] sm:$0xf]
        %v287 = vld [vmem:[%s1 + $0x3c] sm:$0xff]
        %v288 = vld [vmem:[%s1 + $0x44] sm:$0xff]
        %v289 = vld [vmem:[%s1 + $0x4c] sm:$0xf]
        %v290 = vld [vmem:[%s1 + $0x50] sm:$0xff]
        %v291 = vld [vmem:[%s1 + $0x58] sm:$0xff]
        %v292 = vld [vmem:[%s1 + $0x60] sm:$0xf]
        %v293 = vld [vmem:[%s1 + $0x64] sm:$0xff]
        %v294 = vld [vmem:[%s1 + $0x6c] sm:$0xff]
        %v295 = vld [vmem:[%s1 + $0x74] sm:$0xf]
        %v296 = vld [vmem:[%s1 + $0x78] sm:$0xff]
        %v297 = vld [vmem:[%s1 + $0x80] sm:$0xff]
        %v298 = vld [vmem:[%s1 + $0x88] sm:$0xf]
        %v299 = vld [vmem:[%s1 + $0x8c] sm:$0xff]
        %v300 = vld [vmem:[%s1 + $0x94] sm:$0xff]
        %v301 = vld [vmem:[%s1 + $0x9c] sm:$0xf]
        %v302 = vld [vmem:[%s1 + $0xa0] sm:$0xff]
        %v303 = vld [vmem:[%s1 + $0xa8] sm:$0xff]
        %v304 = vld [vmem:[%s1 + $0xb0] sm:$0xf]
        %v305 = vld [vmem:[%s1 + $0xb4] sm:$0xff]
        %v306 = vld [vmem:[%s1 + $0xbc] sm:$0xff]
        %v307 = vld [vmem:[%s1 + $0xc4] sm:$0xf]
        %v308 = vld [vmem:[%s1 + $0xc8] sm:$0xff]
        %v309 = vld [vmem:[%s1 + $0xd0] sm:$0xff]
        %v310 = vld [vmem:[%s1 + $0xd8] sm:$0xf]
        %v311 = vld [vmem:[%s1 + $0xdc] sm:$0xff]
        %v312 = vld [vmem:[%s1 + $0xe4] sm:$0xff]
        %v313 = vld [vmem:[%s1 + $0xec] sm:$0xf]
        %v314 = vld [vmem:[%s1 + $0xf0] sm:$0xff]
        %v315 = vld [vmem:[%s1 + $0xf8] sm:$0xff]
        %v316 = vld [vmem:[%s1 + $0x100] sm:$0xf]
        %v317 = vld [vmem:[%s1 + $0x104] sm:$0xff]
        %v318 = vld [vmem:[%s1 + $0x10c] sm:$0xff]
        %v319 = vld [vmem:[%s1 + $0x114] sm:$0xf]
        %v320 = vld [vmem:[%s1 + $0x118] sm:$0xff]
        %v321 = vld [vmem:[%s1 + $0x120] sm:$0xff]
        %v322 = vld [vmem:[%s1 + $0x128] sm:$0xf]
        %v323 = vld [vmem:[%s1 + $0x12c] sm:$0xff]
        %v324 = vld [vmem:[%s1 + $0x134] sm:$0xff]
        %v325 = vld [vmem:[%s1 + $0x13c] sm:$0xf]
        %v326 = vld [vmem:[%s2] sm:$0x1f]
        %v328 = vlaneseq
        %v329 = vshrl.u32 %v328, 7
        %v330 = vsub.s32 0, %v329
        %v331 = vrot.slane %v326, %v330
        %v332 = vlaneseq
        %v333 = vshrl.u32 %v332, 7
        %v334 = vsub.s32 1, %v333
        %v335 = vrot.slane %v326, %v334
        %v336 = vlaneseq
        %v337 = vshrl.u32 %v336, 7
        %v338 = vsub.s32 2, %v337
        %v339 = vrot.slane %v326, %v338
        %v340 = vlaneseq
        %v341 = vshrl.u32 %v340, 7
        %v342 = vsub.s32 3, %v341
        %v343 = vrot.slane %v326, %v342
        %v344 = vlaneseq
        %v345 = vshrl.u32 %v344, 7
        %v346 = vsub.s32 4, %v345
        %v347 = vrot.slane %v326, %v346
        %v401 = vunpack.c.l.b16 %v278
        %v402 = vunpack.c.h.b16 %v278
        %v403 = vunpack.c.l.b16 %v279
        %v404 = vunpack.c.h.b16 %v279
        %v405 = vunpack.c.l.b16 %v280
        %v406 = vunpack.c.l.b16 %v281
        %v407 = vunpack.c.h.b16 %v281
        %v408 = vunpack.c.l.b16 %v282
        %v409 = vunpack.c.h.b16 %v282
        %v410 = vunpack.c.l.b16 %v283
        %v411 = vunpack.c.l.b16 %v284
        %v412 = vunpack.c.h.b16 %v284
        %v413 = vunpack.c.l.b16 %v285
        %v414 = vunpack.c.h.b16 %v285
        %v415 = vunpack.c.l.b16 %v286
        %v416 = vunpack.c.l.b16 %v287
        %v417 = vunpack.c.h.b16 %v287
        %v418 = vunpack.c.l.b16 %v288
        %v419 = vunpack.c.h.b16 %v288
        %v420 = vunpack.c.l.b16 %v289
        %v421 = vunpack.c.l.b16 %v290
        %v422 = vunpack.c.h.b16 %v290
        %v423 = vunpack.c.l.b16 %v291
        %v424 = vunpack.c.h.b16 %v291
        %v425 = vunpack.c.l.b16 %v292
        %v426 = vunpack.c.l.b16 %v293
        %v427 = vunpack.c.h.b16 %v293
        %v428 = vunpack.c.l.b16 %v294
        %v429 = vunpack.c.h.b16 %v294
        %v430 = vunpack.c.l.b16 %v295
        %v431 = vunpack.c.l.b16 %v296
        %v432 = vunpack.c.h.b16 %v296
        %v433 = vunpack.c.l.b16 %v297
        %v434 = vunpack.c.h.b16 %v297
        %v435 = vunpack.c.l.b16 %v298
        %v436 = vunpack.c.l.b16 %v299
        %v437 = vunpack.c.h.b16 %v299
        %v438 = vunpack.c.l.b16 %v300
        %v439 = vunpack.c.h.b16 %v300
        %v440 = vunpack.c.l.b16 %v301
        %v441 = vunpack.c.l.b16 %v302
        %v442 = vunpack.c.h.b16 %v302
        %v443 = vunpack.c.l.b16 %v303
        %v444 = vunpack.c.h.b16 %v303
        %v445 = vunpack.c.l.b16 %v304
        %v446 = vunpack.c.l.b16 %v305
        %v447 = vunpack.c.h.b16 %v305
        %v448 = vunpack.c.l.b16 %v306
        %v449 = vunpack.c.h.b16 %v306
        %v450 = vunpack.c.l.b16 %v307
        %v451 = vunpack.c.l.b16 %v308
        %v452 = vunpack.c.h.b16 %v308
        %v453 = vunpack.c.l.b16 %v309
        %v454 = vunpack.c.h.b16 %v309
        %v455 = vunpack.c.l.b16 %v310
        %v456 = vunpack.c.l.b16 %v311
        %v457 = vunpack.c.h.b16 %v311
        %v458 = vunpack.c.l.b16 %v312
        %v459 = vunpack.c.h.b16 %v312
        %v460 = vunpack.c.l.b16 %v313
        %v461 = vunpack.c.l.b16 %v314
        %v462 = vunpack.c.h.b16 %v314
        %v463 = vunpack.c.l.b16 %v315
        %v464 = vunpack.c.h.b16 %v315
        %v465 = vunpack.c.l.b16 %v316
        %v466 = vunpack.c.l.b16 %v317
        %v467 = vunpack.c.h.b16 %v317
        %v468 = vunpack.c.l.b16 %v318
        %v469 = vunpack.c.h.b16 %v318
        %v470 = vunpack.c.l.b16 %v319
        %v471 = vunpack.c.l.b16 %v320
        %v472 = vunpack.c.h.b16 %v320
        %v473 = vunpack.c.l.b16 %v321
        %v474 = vunpack.c.h.b16 %v321
        %v475 = vunpack.c.l.b16 %v322
        %v476 = vunpack.c.l.b16 %v323
        %v477 = vunpack.c.h.b16 %v323
        %v478 = vunpack.c.l.b16 %v324
        %v479 = vunpack.c.h.b16 %v324
        %v480 = vunpack.c.l.b16 %v325
        %v481 = vpack.c.b16 %v406, %v401
        %v482 = vpack.c.b16 %v407, %v402
        %v483 = vpack.c.b16 %v408, %v403
        %v484 = vpack.c.b16 %v409, %v404
        %v485 = vpack.c.b16 %v410, %v405
        %v486 = vpack.c.b16 %v416, %v411
        %v487 = vpack.c.b16 %v417, %v412
        %v488 = vpack.c.b16 %v418, %v413
        %v489 = vpack.c.b16 %v419, %v414
        %v490 = vpack.c.b16 %v420, %v415
        %v491 = vpack.c.b16 %v426, %v421
        %v492 = vpack.c.b16 %v427, %v422
        %v493 = vpack.c.b16 %v428, %v423
        %v494 = vpack.c.b16 %v429, %v424
        %v495 = vpack.c.b16 %v430, %v425
        %v496 = vpack.c.b16 %v436, %v431
        %v497 = vpack.c.b16 %v437, %v432
        %v498 = vpack.c.b16 %v438, %v433
        %v499 = vpack.c.b16 %v439, %v434
        %v500 = vpack.c.b16 %v440, %v435
        %v501 = vpack.c.b16 %v446, %v441
        %v502 = vpack.c.b16 %v447, %v442
        %v503 = vpack.c.b16 %v448, %v443
        %v504 = vpack.c.b16 %v449, %v444
        %v505 = vpack.c.b16 %v450, %v445
        %v506 = vpack.c.b16 %v456, %v451
        %v507 = vpack.c.b16 %v457, %v452
        %v508 = vpack.c.b16 %v458, %v453
        %v509 = vpack.c.b16 %v459, %v454
        %v510 = vpack.c.b16 %v460, %v455
        %v511 = vpack.c.b16 %v466, %v461
        %v512 = vpack.c.b16 %v467, %v462
        %v513 = vpack.c.b16 %v468, %v463
        %v514 = vpack.c.b16 %v469, %v464
        %v515 = vpack.c.b16 %v470, %v465
        %v516 = vpack.c.b16 %v476, %v471
        %v517 = vpack.c.b16 %v477, %v472
        %v518 = vpack.c.b16 %v478, %v473
        %v519 = vpack.c.b16 %v479, %v474
        %v520 = vpack.c.b16 %v480, %v475
        %561 = vmatprep.subr.bf16.mxu0 %v482
        %562 = vmatpush1.bf16.msra.mxu0 %v481
        %563 = vmatprep.subr.bf16.mxu0 %v487
        %564 = vmatpush1.bf16.msra.mxu0 %v486
        %565 = vmatprep.subr.bf16.mxu0 %v492
        %566 = vmatpush1.bf16.msra.mxu0 %v491
        %567 = vmatprep.subr.bf16.mxu0 %v497
        %568 = vmatpush1.bf16.msra.mxu0 %v496
        %569 = vmatprep.subr.bf16.mxu0 %v502
        %570 = vmatpush1.bf16.msra.mxu0 %v501
        %571 = vmatprep.subr.bf16.mxu0 %v507
        %572 = vmatpush1.bf16.msra.mxu0 %v506
        %573 = vmatprep.subr.bf16.mxu0 %v512
        %574 = vmatpush1.bf16.msra.mxu0 %v511
        %575 = vmatprep.subr.bf16.mxu0 %v517
        %576 = vmatpush1.bf16.msra.mxu0 %v516
        %577 = vmatprep.subr.bf16.mxu0 0
        %578 = vmatpush1.bf16.msra.mxu0 0
        %579 = vmatprep.subr.bf16.mxu0 0
        %580 = vmatpush1.bf16.msra.mxu0 0
        %581 = vmatprep.subr.bf16.mxu0 0
        %582 = vmatpush1.bf16.msra.mxu0 0
        %583 = vmatprep.subr.bf16.mxu0 0
        %584 = vmatpush1.bf16.msra.mxu0 0
        %585 = vmatprep.subr.bf16.mxu0 0
        %586 = vmatpush1.bf16.msra.mxu0 0
        %587 = vmatprep.subr.bf16.mxu0 0
        %588 = vmatpush1.bf16.msra.mxu0 0
        %589 = vmatprep.subr.bf16.mxu0 0
        %590 = vmatpush1.bf16.msra.mxu0 0
        %591 = vmatprep.subr.bf16.mxu0 0
        %592 = vmatpush1.bf16.msra.mxu0 0
        %593 = vmatprep.mubr.bf16.mxu0 0
        %594 = vmatmul.mubr.bf16.gmra.mrb[0].mxu0 %v270
        %v595 = vpop.f32.mrb[0].mxu0
        %v596 = vadd.f32 %v331, %v595
        %v597 = vpop.f32.mrb[0].mxu0
        %v598 = vadd.f32 %v335, %v597
        %v599 = vpop.f32.mrb[0].mxu0
        %v600 = vadd.f32 %v331, %v599
        %v601 = vpop.f32.mrb[0].mxu0
        %v602 = vadd.f32 %v335, %v601
        %603 = vmatprep.mubr.bf16.mxu0 0
        %604 = vmatmul.mubr.bf16.gmra.mrb[0].mxu0 %v271
        %v605 = vpop.f32.mrb[0].mxu0
        %v606 = vadd.f32 %v331, %v605
        %v607 = vpop.f32.mrb[0].mxu0
        %v608 = vadd.f32 %v335, %v607
        %v609 = vpop.f32.mrb[0].mxu0
        %v610 = vadd.f32 %v331, %v609
        %v611 = vpop.f32.mrb[0].mxu0
        %v612 = vadd.f32 %v335, %v611
        %613 = vmatprep.mubr.bf16.mxu0 0
        %614 = vmatmul.mubr.bf16.gmra.mrb[0].mxu0 %v272
        %v615 = vpop.f32.mrb[0].mxu0
        %v616 = vadd.f32 %v331, %v615
        %v617 = vpop.f32.mrb[0].mxu0
        %v618 = vadd.f32 %v335, %v617
        %v619 = vpop.f32.mrb[0].mxu0
        %v620 = vadd.f32 %v331, %v619
        %v621 = vpop.f32.mrb[0].mxu0
        %v622 = vadd.f32 %v335, %v621
        %623 = vmatprep.mubr.bf16.mxu0 0
        %624 = vmatmul.mubr.bf16.gmra.mrb[0].mxu0 %v273
        %v625 = vpop.f32.mrb[0].mxu0
        %v626 = vadd.f32 %v331, %v625
        %v627 = vpop.f32.mrb[0].mxu0
        %v628 = vadd.f32 %v335, %v627
        %v629 = vpop.f32.mrb[0].mxu0
        %v630 = vadd.f32 %v331, %v629
        %v631 = vpop.f32.mrb[0].mxu0
        %v632 = vadd.f32 %v335, %v631
        %633 = vmatprep.mubr.bf16.mxu0 0
        %634 = vmatmul.mubr.bf16.gmra.mrb[0].mxu0 %v274
        %v635 = vpop.f32.mrb[0].mxu0
        %v636 = vadd.f32 %v331, %v635
        %v637 = vpop.f32.mrb[0].mxu0
        %v638 = vadd.f32 %v335, %v637
        %v639 = vpop.f32.mrb[0].mxu0
        %v640 = vadd.f32 %v331, %v639
        %v641 = vpop.f32.mrb[0].mxu0
        %v642 = vadd.f32 %v335, %v641
        %643 = vmatprep.mubr.bf16.mxu0 0
        %644 = vmatmul.mubr.bf16.gmra.mrb[0].mxu0 %v275
        %v645 = vpop.f32.mrb[0].mxu0
        %v646 = vadd.f32 %v331, %v645
        %v647 = vpop.f32.mrb[0].mxu0
        %v648 = vadd.f32 %v335, %v647
        %v649 = vpop.f32.mrb[0].mxu0
        %v650 = vadd.f32 %v331, %v649
        %v651 = vpop.f32.mrb[0].mxu0
        %v652 = vadd.f32 %v335, %v651
        %653 = vmatprep.mubr.bf16.mxu0 0
        %654 = vmatmul.mubr.bf16.gmra.mrb[0].mxu0 %v276
        %v655 = vpop.f32.mrb[0].mxu0
        %v656 = vadd.f32 %v331, %v655
        %v657 = vpop.f32.mrb[0].mxu0
        %v658 = vadd.f32 %v335, %v657
        %v659 = vpop.f32.mrb[0].mxu0
        %v660 = vadd.f32 %v331, %v659
        %v661 = vpop.f32.mrb[0].mxu0
        %v662 = vadd.f32 %v335, %v661
        %663 = vmatprep.mubr.bf16.mxu0 0
        %664 = vmatmul.mubr.bf16.gmra.mrb[0].mxu0 %v277
        %v665 = vpop.f32.mrb[0].mxu0
        %v666 = vadd.f32 %v331, %v665
        %v667 = vpop.f32.mrb[0].mxu0
        %v668 = vadd.f32 %v335, %v667
        %v669 = vpop.f32.mrb[0].mxu0
        %v670 = vadd.f32 %v331, %v669
        %v671 = vpop.f32.mrb[0].mxu0
        %v672 = vadd.f32 %v335, %v671
        %673 = vdwg.mxu0
        %674 = vmatprep.subr.bf16.mxu0 %v484
        %675 = vmatpush1.bf16.msra.mxu0 %v483
        %676 = vmatprep.subr.bf16.mxu0 %v489
        %677 = vmatpush1.bf16.msra.mxu0 %v488
        %678 = vmatprep.subr.bf16.mxu0 %v494
        %679 = vmatpush1.bf16.msra.mxu0 %v493
        %680 = vmatprep.subr.bf16.mxu0 %v499
        %681 = vmatpush1.bf16.msra.mxu0 %v498
        %682 = vmatprep.subr.bf16.mxu0 %v504
        %683 = vmatpush1.bf16.msra.mxu0 %v503
        %684 = vmatprep.subr.bf16.mxu0 %v509
        %685 = vmatpush1.bf16.msra.mxu0 %v508
        %686 = vmatprep.subr.bf16.mxu0 %v514
        %687 = vmatpush1.bf16.msra.mxu0 %v513
        %688 = vmatprep.subr.bf16.mxu0 %v519
        %689 = vmatpush1.bf16.msra.mxu0 %v518
        %690 = vmatprep.subr.bf16.mxu0 0
        %691 = vmatpush1.bf16.msra.mxu0 0
        %692 = vmatprep.subr.bf16.mxu0 0
        %693 = vmatpush1.bf16.msra.mxu0 0
        %694 = vmatprep.subr.bf16.mxu0 0
        %695 = vmatpush1.bf16.msra.mxu0 0
        %696 = vmatprep.subr.bf16.mxu0 0
        %697 = vmatpush1.bf16.msra.mxu0 0
        %698 = vmatprep.subr.bf16.mxu0 0
        %699 = vmatpush1.bf16.msra.mxu0 0
        %700 = vmatprep.subr.bf16.mxu0 0
        %701 = vmatpush1.bf16.msra.mxu0 0
        %702 = vmatprep.subr.bf16.mxu0 0
        %703 = vmatpush1.bf16.msra.mxu0 0
        %704 = vmatprep.subr.bf16.mxu0 0
        %705 = vmatpush1.bf16.msra.mxu0 0
        %706 = vmatprep.mubr.bf16.mxu0 0
        %707 = vmatmul.mubr.bf16.gmra.mrb[0].mxu0 %v270
        %v708 = vpop.f32.mrb[0].mxu0
        %v709 = vadd.f32 %v339, %v708
        %v710 = vpop.f32.mrb[0].mxu0
        %v711 = vadd.f32 %v343, %v710
        %v712 = vpop.f32.mrb[0].mxu0
        %v713 = vadd.f32 %v339, %v712
        %v714 = vpop.f32.mrb[0].mxu0
        %v715 = vadd.f32 %v343, %v714
        %716 = vmatprep.mubr.bf16.mxu0 0
        %717 = vmatmul.mubr.bf16.gmra.mrb[0].mxu0 %v271
        %v718 = vpop.f32.mrb[0].mxu0
        %v719 = vadd.f32 %v339, %v718
        %v720 = vpop.f32.mrb[0].mxu0
        %v721 = vadd.f32 %v343, %v720
        %v722 = vpop.f32.mrb[0].mxu0
        %v723 = vadd.f32 %v339, %v722
        %v724 = vpop.f32.mrb[0].mxu0
        %v725 = vadd.f32 %v343, %v724
        %726 = vmatprep.mubr.bf16.mxu0 0
        %727 = vmatmul.mubr.bf16.gmra.mrb[0].mxu0 %v272
        %v728 = vpop.f32.mrb[0].mxu0
        %v729 = vadd.f32 %v339, %v728
        %v730 = vpop.f32.mrb[0].mxu0
        %v731 = vadd.f32 %v343, %v730
        %v732 = vpop.f32.mrb[0].mxu0
        %v733 = vadd.f32 %v339, %v732
        %v734 = vpop.f32.mrb[0].mxu0
        %v735 = vadd.f32 %v343, %v734
        %736 = vmatprep.mubr.bf16.mxu0 0
        %737 = vmatmul.mubr.bf16.gmra.mrb[0].mxu0 %v273
        %v738 = vpop.f32.mrb[0].mxu0
        %v739 = vadd.f32 %v339, %v738
        %v740 = vpop.f32.mrb[0].mxu0
        %v741 = vadd.f32 %v343, %v740
        %v742 = vpop.f32.mrb[0].mxu0
        %v743 = vadd.f32 %v339, %v742
        %v744 = vpop.f32.mrb[0].mxu0
        %v745 = vadd.f32 %v343, %v744
        %746 = vmatprep.mubr.bf16.mxu0 0
        %747 = vmatmul.mubr.bf16.gmra.mrb[0].mxu0 %v274
        %v748 = vpop.f32.mrb[0].mxu0
        %v749 = vadd.f32 %v339, %v748
        %v750 = vpop.f32.mrb[0].mxu0
        %v751 = vadd.f32 %v343, %v750
        %v752 = vpop.f32.mrb[0].mxu0
        %v753 = vadd.f32 %v339, %v752
        %v754 = vpop.f32.mrb[0].mxu0
        %v755 = vadd.f32 %v343, %v754
        %756 = vmatprep.mubr.bf16.mxu0 0
        %757 = vmatmul.mubr.bf16.gmra.mrb[0].mxu0 %v275
        %v758 = vpop.f32.mrb[0].mxu0
        %v759 = vadd.f32 %v339, %v758
        %v760 = vpop.f32.mrb[0].mxu0
        %v761 = vadd.f32 %v343, %v760
        %v762 = vpop.f32.mrb[0].mxu0
        %v763 = vadd.f32 %v339, %v762
        %v764 = vpop.f32.mrb[0].mxu0
        %v765 = vadd.f32 %v343, %v764
        %766 = vmatprep.mubr.bf16.mxu0 0
        %767 = vmatmul.mubr.bf16.gmra.mrb[0].mxu0 %v276
        %v768 = vpop.f32.mrb[0].mxu0
        %v769 = vadd.f32 %v339, %v768
        %v770 = vpop.f32.mrb[0].mxu0
        %v771 = vadd.f32 %v343, %v770
        %v772 = vpop.f32.mrb[0].mxu0
        %v773 = vadd.f32 %v339, %v772
        %v774 = vpop.f32.mrb[0].mxu0
        %v775 = vadd.f32 %v343, %v774
        %776 = vmatprep.mubr.bf16.mxu0 0
        %777 = vmatmul.mubr.bf16.gmra.mrb[0].mxu0 %v277
        %v778 = vpop.f32.mrb[0].mxu0
        %v779 = vadd.f32 %v339, %v778
        %v780 = vpop.f32.mrb[0].mxu0
        %v781 = vadd.f32 %v343, %v780
        %v782 = vpop.f32.mrb[0].mxu0
        %v783 = vadd.f32 %v339, %v782
        %v784 = vpop.f32.mrb[0].mxu0
        %v785 = vadd.f32 %v343, %v784
        %786 = vdwg.mxu0
        %787 = vmatprep.subr.bf16.mxu0 0
        %788 = vmatpush1.bf16.msra.mxu0 %v485
        %789 = vmatprep.subr.bf16.mxu0 0
        %790 = vmatpush1.bf16.msra.mxu0 %v490
        %791 = vmatprep.subr.bf16.mxu0 0
        %792 = vmatpush1.bf16.msra.mxu0 %v495
        %793 = vmatprep.subr.bf16.mxu0 0
        %794 = vmatpush1.bf16.msra.mxu0 %v500
        %795 = vmatprep.subr.bf16.mxu0 0
        %796 = vmatpush1.bf16.msra.mxu0 %v505
        %797 = vmatprep.subr.bf16.mxu0 0
        %798 = vmatpush1.bf16.msra.mxu0 %v510
        %799 = vmatprep.subr.bf16.mxu0 0
        %800 = vmatpush1.bf16.msra.mxu0 %v515
        %801 = vmatprep.subr.bf16.mxu0 0
        %802 = vmatpush1.bf16.msra.mxu0 %v520
        %803 = vmatprep.subr.bf16.mxu0 0
        %804 = vmatpush1.bf16.msra.mxu0 0
        %805 = vmatprep.subr.bf16.mxu0 0
        %806 = vmatpush1.bf16.msra.mxu0 0
        %807 = vmatprep.subr.bf16.mxu0 0
        %808 = vmatpush1.bf16.msra.mxu0 0
        %809 = vmatprep.subr.bf16.mxu0 0
        %810 = vmatpush1.bf16.msra.mxu0 0
        %811 = vmatprep.subr.bf16.mxu0 0
        %812 = vmatpush1.bf16.msra.mxu0 0
        %813 = vmatprep.subr.bf16.mxu0 0
        %814 = vmatpush1.bf16.msra.mxu0 0
        %815 = vmatprep.subr.bf16.mxu0 0
        %816 = vmatpush1.bf16.msra.mxu0 0
        %817 = vmatprep.subr.bf16.mxu0 0
        %818 = vmatpush1.bf16.msra.mxu0 0
        %819 = vmatprep.mubr.bf16.mxu0 0
        %820 = vmatmul.mubr.bf16.gmra.mrb[0].mxu0 %v270
        %v821 = vpop.f32.mrb[0].mxu0
        %v822 = vadd.f32 %v347, %v821
        %v823 = vpop.f32.mrb[0].mxu0
        %v824 = vpop.f32.mrb[0].mxu0
        %v825 = vadd.f32 %v347, %v824
        %v826 = vpop.f32.mrb[0].mxu0
        %827 = vmatprep.mubr.bf16.mxu0 0
        %828 = vmatmul.mubr.bf16.gmra.mrb[0].mxu0 %v271
        %v829 = vpop.f32.mrb[0].mxu0
        %v830 = vadd.f32 %v347, %v829
        %v831 = vpop.f32.mrb[0].mxu0
        %v832 = vpop.f32.mrb[0].mxu0
        %v833 = vadd.f32 %v347, %v832
        %v834 = vpop.f32.mrb[0].mxu0
        %835 = vmatprep.mubr.bf16.mxu0 0
        %836 = vmatmul.mubr.bf16.gmra.mrb[0].mxu0 %v272
        %v837 = vpop.f32.mrb[0].mxu0
        %v838 = vadd.f32 %v347, %v837
        %v839 = vpop.f32.mrb[0].mxu0
        %v840 = vpop.f32.mrb[0].mxu0
        %v841 = vadd.f32 %v347, %v840
        %v842 = vpop.f32.mrb[0].mxu0
        %843 = vmatprep.mubr.bf16.mxu0 0
        %844 = vmatmul.mubr.bf16.gmra.mrb[0].mxu0 %v273
        %v845 = vpop.f32.mrb[0].mxu0
        %v846 = vadd.f32 %v347, %v845
        %v847 = vpop.f32.mrb[0].mxu0
        %v848 = vpop.f32.mrb[0].mxu0
        %v849 = vadd.f32 %v347, %v848
        %v850 = vpop.f32.mrb[0].mxu0
        %851 = vmatprep.mubr.bf16.mxu0 0
        %852 = vmatmul.mubr.bf16.gmra.mrb[0].mxu0 %v274
        %v853 = vpop.f32.mrb[0].mxu0
        %v854 = vadd.f32 %v347, %v853
        %v855 = vpop.f32.mrb[0].mxu0
        %v856 = vpop.f32.mrb[0].mxu0
        %v857 = vadd.f32 %v347, %v856
        %v858 = vpop.f32.mrb[0].mxu0
        %859 = vmatprep.mubr.bf16.mxu0 0
        %860 = vmatmul.mubr.bf16.gmra.mrb[0].mxu0 %v275
        %v861 = vpop.f32.mrb[0].mxu0
        %v862 = vadd.f32 %v347, %v861
        %v863 = vpop.f32.mrb[0].mxu0
        %v864 = vpop.f32.mrb[0].mxu0
        %v865 = vadd.f32 %v347, %v864
        %v866 = vpop.f32.mrb[0].mxu0
        %867 = vmatprep.mubr.bf16.mxu0 0
        %868 = vmatmul.mubr.bf16.gmra.mrb[0].mxu0 %v276
        %v869 = vpop.f32.mrb[0].mxu0
        %v870 = vadd.f32 %v347, %v869
        %v871 = vpop.f32.mrb[0].mxu0
        %v872 = vpop.f32.mrb[0].mxu0
        %v873 = vadd.f32 %v347, %v872
        %v874 = vpop.f32.mrb[0].mxu0
        %875 = vmatprep.mubr.bf16.mxu0 0
        %876 = vmatmul.mubr.bf16.gmra.mrb[0].mxu0 %v277
        %v877 = vpop.f32.mrb[0].mxu0
        %v878 = vadd.f32 %v347, %v877
        %v879 = vpop.f32.mrb[0].mxu0
        %v880 = vpop.f32.mrb[0].mxu0
        %v881 = vadd.f32 %v347, %v880
        %v882 = vpop.f32.mrb[0].mxu0
        %883 = vdwg.mxu0
        %v884 = vmul.f32 %v596, %v709
        %v885 = vmul.f32 %v600, %v713
        %v886 = vmul.f32 %v606, %v719
        %v887 = vmul.f32 %v610, %v723
        %v888 = vmul.f32 %v616, %v729
        %v889 = vmul.f32 %v620, %v733
        %v890 = vmul.f32 %v626, %v739
        %v891 = vmul.f32 %v630, %v743
        %v892 = vmul.f32 %v636, %v749
        %v893 = vmul.f32 %v640, %v753
        %v894 = vmul.f32 %v646, %v759
        %v895 = vmul.f32 %v650, %v763
        %v896 = vmul.f32 %v656, %v769
        %v897 = vmul.f32 %v660, %v773
        %v898 = vmul.f32 %v666, %v779
        %v899 = vmul.f32 %v670, %v783
        %v900 = vmul.f32 %v598, %v711
        %v901 = vmul.f32 %v602, %v715
        %v902 = vmul.f32 %v608, %v721
        %v903 = vmul.f32 %v612, %v725
        %v904 = vmul.f32 %v618, %v731
        %v905 = vmul.f32 %v622, %v735
        %v906 = vmul.f32 %v628, %v741
        %v907 = vmul.f32 %v632, %v745
        %v908 = vmul.f32 %v638, %v751
        %v909 = vmul.f32 %v642, %v755
        %v910 = vmul.f32 %v648, %v761
        %v911 = vmul.f32 %v652, %v765
        %v912 = vmul.f32 %v658, %v771
        %v913 = vmul.f32 %v662, %v775
        %v914 = vmul.f32 %v668, %v781
        %v915 = vmul.f32 %v672, %v785
        %v916 = vadd.f32 %v884, %v900
        %v917 = vadd.f32 %v885, %v901
        %v918 = vadd.f32 %v886, %v902
        %v919 = vadd.f32 %v887, %v903
        %v920 = vadd.f32 %v888, %v904
        %v921 = vadd.f32 %v889, %v905
        %v922 = vadd.f32 %v890, %v906
        %v923 = vadd.f32 %v891, %v907
        %v924 = vadd.f32 %v892, %v908
        %v925 = vadd.f32 %v893, %v909
        %v926 = vadd.f32 %v894, %v910
        %v927 = vadd.f32 %v895, %v911
        %v928 = vadd.f32 %v896, %v912
        %v929 = vadd.f32 %v897, %v913
        %v930 = vadd.f32 %v898, %v914
        %v931 = vadd.f32 %v899, %v915
        %v932 = vmul.f32 %v598, %v709
        %v933 = vmul.f32 %v602, %v713
        %v934 = vmul.f32 %v608, %v719
        %v935 = vmul.f32 %v612, %v723
        %v936 = vmul.f32 %v618, %v729
        %v937 = vmul.f32 %v622, %v733
        %v938 = vmul.f32 %v628, %v739
        %v939 = vmul.f32 %v632, %v743
        %v940 = vmul.f32 %v638, %v749
        %v941 = vmul.f32 %v642, %v753
        %v942 = vmul.f32 %v648, %v759
        %v943 = vmul.f32 %v652, %v763
        %v944 = vmul.f32 %v658, %v769
        %v945 = vmul.f32 %v662, %v773
        %v946 = vmul.f32 %v668, %v779
        %v947 = vmul.f32 %v672, %v783
        %v948 = vmul.f32 %v596, %v711
        %v949 = vmul.f32 %v600, %v715
        %v950 = vmul.f32 %v606, %v721
        %v951 = vmul.f32 %v610, %v725
        %v952 = vmul.f32 %v616, %v731
        %v953 = vmul.f32 %v620, %v735
        %v954 = vmul.f32 %v626, %v741
        %v955 = vmul.f32 %v630, %v745
        %v956 = vmul.f32 %v636, %v751
        %v957 = vmul.f32 %v640, %v755
        %v958 = vmul.f32 %v646, %v761
        %v959 = vmul.f32 %v650, %v765
        %v960 = vmul.f32 %v656, %v771
        %v961 = vmul.f32 %v660, %v775
        %v962 = vmul.f32 %v666, %v781
        %v963 = vmul.f32 %v670, %v785
        %v964 = vsub.f32 %v932, %v948
        %v965 = vsub.f32 %v933, %v949
        %v966 = vsub.f32 %v934, %v950
        %v967 = vsub.f32 %v935, %v951
        %v968 = vsub.f32 %v936, %v952
        %v969 = vsub.f32 %v937, %v953
        %v970 = vsub.f32 %v938, %v954
        %v971 = vsub.f32 %v939, %v955
        %v972 = vsub.f32 %v940, %v956
        %v973 = vsub.f32 %v941, %v957
        %v974 = vsub.f32 %v942, %v958
        %v975 = vsub.f32 %v943, %v959
        %v976 = vsub.f32 %v944, %v960
        %v977 = vsub.f32 %v945, %v961
        %v978 = vsub.f32 %v946, %v962
        %v979 = vsub.f32 %v947, %v963
        %v980 = vpack.c.bf16 %v917, %v916
        %v981 = vpack.c.bf16 %v919, %v918
        %v982 = vpack.c.bf16 %v921, %v920
        %v983 = vpack.c.bf16 %v923, %v922
        %v984 = vpack.c.bf16 %v925, %v924
        %v985 = vpack.c.bf16 %v927, %v926
        %v986 = vpack.c.bf16 %v929, %v928
        %v987 = vpack.c.bf16 %v931, %v930
        %v988 = vpack.c.bf16 %v965, %v964
        %v989 = vpack.c.bf16 %v967, %v966
        %v990 = vpack.c.bf16 %v969, %v968
        %v991 = vpack.c.bf16 %v971, %v970
        %v992 = vpack.c.bf16 %v973, %v972
        %v993 = vpack.c.bf16 %v975, %v974
        %v994 = vpack.c.bf16 %v977, %v976
        %v995 = vpack.c.bf16 %v979, %v978
        %v996 = vld [vmem:[%s3] sm:$0xf]
        %v997 = vld [vmem:[%s3 + $0x4] sm:$0xf]
        %v998 = vld [vmem:[%s3 + $0x8] sm:$0xf]
        %v999 = vld [vmem:[%s3 + $0xc] sm:$0xf]
        %v1000 = vld [vmem:[%s3 + $0x10] sm:$0xf]
        %v1001 = vld [vmem:[%s3 + $0x14] sm:$0xf]
        %v1002 = vld [vmem:[%s3 + $0x18] sm:$0xf]
        %v1003 = vld [vmem:[%s3 + $0x1c] sm:$0xf]
        %v1004 = vld [vmem:[%s3 + $0x20] sm:$0xf]
        %v1005 = vld [vmem:[%s3 + $0x24] sm:$0xf]
        %v1006 = vld [vmem:[%s3 + $0x28] sm:$0xf]
        %v1007 = vld [vmem:[%s3 + $0x2c] sm:$0xf]
        %v1008 = vld [vmem:[%s3 + $0x30] sm:$0xf]
        %v1009 = vld [vmem:[%s3 + $0x34] sm:$0xf]
        %v1010 = vld [vmem:[%s3 + $0x38] sm:$0xf]
        %v1011 = vld [vmem:[%s3 + $0x3c] sm:$0xf]
        %v1012 = vld [vmem:[%s3 + $0x40] sm:$0xf]
        %v1013 = vld [vmem:[%s3 + $0x44] sm:$0xf]
        %v1014 = vld [vmem:[%s3 + $0x48] sm:$0xf]
        %v1015 = vld [vmem:[%s3 + $0x4c] sm:$0xf]
        %v1016 = vld [vmem:[%s3 + $0x50] sm:$0xf]
        %v1017 = vld [vmem:[%s3 + $0x54] sm:$0xf]
        %v1018 = vld [vmem:[%s3 + $0x58] sm:$0xf]
        %v1019 = vld [vmem:[%s3 + $0x5c] sm:$0xf]
        %v1020 = vld [vmem:[%s3 + $0x60] sm:$0xf]
        %v1021 = vld [vmem:[%s3 + $0x64] sm:$0xf]
        %v1022 = vld [vmem:[%s3 + $0x68] sm:$0xf]
        %v1023 = vld [vmem:[%s3 + $0x6c] sm:$0xf]
        %v1024 = vld [vmem:[%s3 + $0x70] sm:$0xf]
        %v1025 = vld [vmem:[%s3 + $0x74] sm:$0xf]
        %v1026 = vld [vmem:[%s3 + $0x78] sm:$0xf]
        %v1027 = vld [vmem:[%s3 + $0x7c] sm:$0xf]
        %v1060 = vunpack.c.l.b16 %v996
        %v1061 = vunpack.c.l.b16 %v997
        %v1062 = vunpack.c.l.b16 %v998
        %v1063 = vunpack.c.l.b16 %v999
        %v1064 = vunpack.c.l.b16 %v1000
        %v1065 = vunpack.c.l.b16 %v1001
        %v1066 = vunpack.c.l.b16 %v1002
        %v1067 = vunpack.c.l.b16 %v1003
        %v1068 = vunpack.c.l.b16 %v1004
        %v1069 = vunpack.c.l.b16 %v1005
        %v1070 = vunpack.c.l.b16 %v1006
        %v1071 = vunpack.c.l.b16 %v1007
        %v1072 = vunpack.c.l.b16 %v1008
        %v1073 = vunpack.c.l.b16 %v1009
        %v1074 = vunpack.c.l.b16 %v1010
        %v1075 = vunpack.c.l.b16 %v1011
        %v1076 = vunpack.c.l.b16 %v1012
        %v1077 = vunpack.c.l.b16 %v1013
        %v1078 = vunpack.c.l.b16 %v1014
        %v1079 = vunpack.c.l.b16 %v1015
        %v1080 = vunpack.c.l.b16 %v1016
        %v1081 = vunpack.c.l.b16 %v1017
        %v1082 = vunpack.c.l.b16 %v1018
        %v1083 = vunpack.c.l.b16 %v1019
        %v1084 = vunpack.c.l.b16 %v1020
        %v1085 = vunpack.c.l.b16 %v1021
        %v1086 = vunpack.c.l.b16 %v1022
        %v1087 = vunpack.c.l.b16 %v1023
        %v1088 = vunpack.c.l.b16 %v1024
        %v1089 = vunpack.c.l.b16 %v1025
        %v1090 = vunpack.c.l.b16 %v1026
        %v1091 = vunpack.c.l.b16 %v1027
        %v1092 = vpack.c.b16 %v1061, %v1060
        %v1093 = vpack.c.b16 %v1063, %v1062
        %v1094 = vpack.c.b16 %v1065, %v1064
        %v1095 = vpack.c.b16 %v1067, %v1066
        %v1096 = vpack.c.b16 %v1069, %v1068
        %v1097 = vpack.c.b16 %v1071, %v1070
        %v1098 = vpack.c.b16 %v1073, %v1072
        %v1099 = vpack.c.b16 %v1075, %v1074
        %v1100 = vpack.c.b16 %v1077, %v1076
        %v1101 = vpack.c.b16 %v1079, %v1078
        %v1102 = vpack.c.b16 %v1081, %v1080
        %v1103 = vpack.c.b16 %v1083, %v1082
        %v1104 = vpack.c.b16 %v1085, %v1084
        %v1105 = vpack.c.b16 %v1087, %v1086
        %v1106 = vpack.c.b16 %v1089, %v1088
        %v1107 = vpack.c.b16 %v1091, %v1090
        %1124 = vmatprep.subr.bf16.mxu0 0
        %1125 = vmatpush1.bf16.msra.mxu0 %v1092
        %1126 = vmatprep.subr.bf16.mxu0 0
        %1127 = vmatpush1.bf16.msra.mxu0 %v1093
        %1128 = vmatprep.subr.bf16.mxu0 0
        %1129 = vmatpush1.bf16.msra.mxu0 %v1094
        %1130 = vmatprep.subr.bf16.mxu0 0
        %1131 = vmatpush1.bf16.msra.mxu0 %v1095
        %1132 = vmatprep.subr.bf16.mxu0 0
        %1133 = vmatpush1.bf16.msra.mxu0 %v1096
        %1134 = vmatprep.subr.bf16.mxu0 0
        %1135 = vmatpush1.bf16.msra.mxu0 %v1097
        %1136 = vmatprep.subr.bf16.mxu0 0
        %1137 = vmatpush1.bf16.msra.mxu0 %v1098
        %1138 = vmatprep.subr.bf16.mxu0 0
        %1139 = vmatpush1.bf16.msra.mxu0 %v1099
        %1140 = vmatprep.subr.bf16.mxu0 0
        %1141 = vmatpush1.bf16.msra.mxu0 %v1100
        %1142 = vmatprep.subr.bf16.mxu0 0
        %1143 = vmatpush1.bf16.msra.mxu0 %v1101
        %1144 = vmatprep.subr.bf16.mxu0 0
        %1145 = vmatpush1.bf16.msra.mxu0 %v1102
        %1146 = vmatprep.subr.bf16.mxu0 0
        %1147 = vmatpush1.bf16.msra.mxu0 %v1103
        %1148 = vmatprep.subr.bf16.mxu0 0
        %1149 = vmatpush1.bf16.msra.mxu0 %v1104
        %1150 = vmatprep.subr.bf16.mxu0 0
        %1151 = vmatpush1.bf16.msra.mxu0 %v1105
        %1152 = vmatprep.subr.bf16.mxu0 0
        %1153 = vmatpush1.bf16.msra.mxu0 %v1106
        %1154 = vmatprep.subr.bf16.mxu0 0
        %1155 = vmatpush1.bf16.msra.mxu0 %v1107
        %1156 = vmatprep.mubr.bf16.mxu0 %v988
        %1157 = vmatmul.mubr.bf16.gmra.mrb[0].mxu0 %v980
        %v1158 = vpop.f32.mrb[0].mxu0
        %v1159 = vadd.f32 0.0, %v1158
        %v1160 = vpop.f32.mrb[0].mxu0
        %v1161 = vpop.f32.mrb[0].mxu0
        %v1162 = vadd.f32 0.0, %v1161
        %v1163 = vpop.f32.mrb[0].mxu0
        %1164 = vmatprep.mubr.bf16.mxu0 %v989
        %1165 = vmatmul.mubr.bf16.gmra.mrb[0].mxu0 %v981
        %v1166 = vpop.f32.mrb[0].mxu0
        %v1167 = vadd.f32 0.0, %v1166
        %v1168 = vpop.f32.mrb[0].mxu0
        %v1169 = vpop.f32.mrb[0].mxu0
        %v1170 = vadd.f32 0.0, %v1169
        %v1171 = vpop.f32.mrb[0].mxu0
        %1172 = vmatprep.mubr.bf16.mxu0 %v990
        %1173 = vmatmul.mubr.bf16.gmra.mrb[0].mxu0 %v982
        %v1174 = vpop.f32.mrb[0].mxu0
        %v1175 = vadd.f32 0.0, %v1174
        %v1176 = vpop.f32.mrb[0].mxu0
        %v1177 = vpop.f32.mrb[0].mxu0
        %v1178 = vadd.f32 0.0, %v1177
        %v1179 = vpop.f32.mrb[0].mxu0
        %1180 = vmatprep.mubr.bf16.mxu0 %v991
        %1181 = vmatmul.mubr.bf16.gmra.mrb[0].mxu0 %v983
        %v1182 = vpop.f32.mrb[0].mxu0
        %v1183 = vadd.f32 0.0, %v1182
        %v1184 = vpop.f32.mrb[0].mxu0
        %v1185 = vpop.f32.mrb[0].mxu0
        %v1186 = vadd.f32 0.0, %v1185
        %v1187 = vpop.f32.mrb[0].mxu0
        %1188 = vmatprep.mubr.bf16.mxu0 %v992
        %1189 = vmatmul.mubr.bf16.gmra.mrb[0].mxu0 %v984
        %v1190 = vpop.f32.mrb[0].mxu0
        %v1191 = vadd.f32 0.0, %v1190
        %v1192 = vpop.f32.mrb[0].mxu0
        %v1193 = vpop.f32.mrb[0].mxu0
        %v1194 = vadd.f32 0.0, %v1193
        %v1195 = vpop.f32.mrb[0].mxu0
        %1196 = vmatprep.mubr.bf16.mxu0 %v993
        %1197 = vmatmul.mubr.bf16.gmra.mrb[0].mxu0 %v985
        %v1198 = vpop.f32.mrb[0].mxu0
        %v1199 = vadd.f32 0.0, %v1198
        %v1200 = vpop.f32.mrb[0].mxu0
        %v1201 = vpop.f32.mrb[0].mxu0
        %v1202 = vadd.f32 0.0, %v1201
        %v1203 = vpop.f32.mrb[0].mxu0
        %1204 = vmatprep.mubr.bf16.mxu0 %v994
        %1205 = vmatmul.mubr.bf16.gmra.mrb[0].mxu0 %v986
        %v1206 = vpop.f32.mrb[0].mxu0
        %v1207 = vadd.f32 0.0, %v1206
        %v1208 = vpop.f32.mrb[0].mxu0
        %v1209 = vpop.f32.mrb[0].mxu0
        %v1210 = vadd.f32 0.0, %v1209
        %v1211 = vpop.f32.mrb[0].mxu0
        %1212 = vmatprep.mubr.bf16.mxu0 %v995
        %1213 = vmatmul.mubr.bf16.gmra.mrb[0].mxu0 %v987
        %v1214 = vpop.f32.mrb[0].mxu0
        %v1215 = vadd.f32 0.0, %v1214
        %v1216 = vpop.f32.mrb[0].mxu0
        %v1217 = vpop.f32.mrb[0].mxu0
        %v1218 = vadd.f32 0.0, %v1217
        %v1219 = vpop.f32.mrb[0].mxu0
        %1220 = vdwg.mxu0
        %v1221 = vmul.f32 %v1159, %v822
        %v1222 = vmul.f32 %v1162, %v825
        %v1223 = vmul.f32 %v1167, %v830
        %v1224 = vmul.f32 %v1170, %v833
        %v1225 = vmul.f32 %v1175, %v838
        %v1226 = vmul.f32 %v1178, %v841
        %v1227 = vmul.f32 %v1183, %v846
        %v1228 = vmul.f32 %v1186, %v849
        %v1229 = vmul.f32 %v1191, %v854
        %v1230 = vmul.f32 %v1194, %v857
        %v1231 = vmul.f32 %v1199, %v862
        %v1232 = vmul.f32 %v1202, %v865
        %v1233 = vmul.f32 %v1207, %v870
        %v1234 = vmul.f32 %v1210, %v873
        %v1235 = vmul.f32 %v1215, %v878
        %v1236 = vmul.f32 %v1218, %v881
        %v1237 = vpack.c.bf16 %v1222, %v1221
        %v1238 = vpack.c.bf16 %v1224, %v1223
        %v1239 = vpack.c.bf16 %v1226, %v1225
        %v1240 = vpack.c.bf16 %v1228, %v1227
        %v1241 = vpack.c.bf16 %v1230, %v1229
        %v1242 = vpack.c.bf16 %v1232, %v1231
        %v1243 = vpack.c.bf16 %v1234, %v1233
        %v1244 = vpack.c.bf16 %v1236, %v1235
        %v1245 = vld [vmem:[%s4] sm:$0xf]
        %v1246 = vld [vmem:[%s4 + $0x4] sm:$0xf]
        %v1247 = vld [vmem:[%s4 + $0x8] sm:$0xf]
        %v1248 = vld [vmem:[%s4 + $0xc] sm:$0xf]
        %v1249 = vld [vmem:[%s4 + $0x10] sm:$0xf]
        %v1250 = vld [vmem:[%s4 + $0x14] sm:$0xf]
        %v1251 = vld [vmem:[%s4 + $0x18] sm:$0xf]
        %v1252 = vld [vmem:[%s4 + $0x1c] sm:$0xf]
        %v1253 = vld [vmem:[%s4 + $0x20] sm:$0xf]
        %v1254 = vld [vmem:[%s4 + $0x24] sm:$0xf]
        %v1255 = vld [vmem:[%s4 + $0x28] sm:$0xf]
        %v1256 = vld [vmem:[%s4 + $0x2c] sm:$0xf]
        %v1257 = vld [vmem:[%s4 + $0x30] sm:$0xf]
        %v1258 = vld [vmem:[%s4 + $0x34] sm:$0xf]
        %v1259 = vld [vmem:[%s4 + $0x38] sm:$0xf]
        %v1260 = vld [vmem:[%s4 + $0x3c] sm:$0xf]
        %v1261 = vld [vmem:[%s5] sm:$0x1]
        %v1263 = vlaneseq
        %v1264 = vshrl.u32 %v1263, 7
        %v1265 = vsub.s32 0, %v1264
        %v1266 = vrot.slane %v1261, %v1265
        %v1284 = vunpack.c.l.b16 %v1245
        %v1285 = vunpack.c.l.b16 %v1246
        %v1286 = vunpack.c.l.b16 %v1247
        %v1287 = vunpack.c.l.b16 %v1248
        %v1288 = vunpack.c.l.b16 %v1249
        %v1289 = vunpack.c.l.b16 %v1250
        %v1290 = vunpack.c.l.b16 %v1251
        %v1291 = vunpack.c.l.b16 %v1252
        %v1292 = vunpack.c.l.b16 %v1253
        %v1293 = vunpack.c.l.b16 %v1254
        %v1294 = vunpack.c.l.b16 %v1255
        %v1295 = vunpack.c.l.b16 %v1256
        %v1296 = vunpack.c.l.b16 %v1257
        %v1297 = vunpack.c.l.b16 %v1258
        %v1298 = vunpack.c.l.b16 %v1259
        %v1299 = vunpack.c.l.b16 %v1260
        %v1300 = vpack.c.b16 %v1285, %v1284
        %v1301 = vpack.c.b16 %v1287, %v1286
        %v1302 = vpack.c.b16 %v1289, %v1288
        %v1303 = vpack.c.b16 %v1291, %v1290
        %v1304 = vpack.c.b16 %v1293, %v1292
        %v1305 = vpack.c.b16 %v1295, %v1294
        %v1306 = vpack.c.b16 %v1297, %v1296
        %v1307 = vpack.c.b16 %v1299, %v1298
        %1316 = vmatprep.subr.bf16.mxu0 0
        %1317 = vmatpush1.bf16.msra.mxu0 %v1300
        %1318 = vmatprep.subr.bf16.mxu0 0
        %1319 = vmatpush1.bf16.msra.mxu0 %v1301
        %1320 = vmatprep.subr.bf16.mxu0 0
        %1321 = vmatpush1.bf16.msra.mxu0 %v1302
        %1322 = vmatprep.subr.bf16.mxu0 0
        %1323 = vmatpush1.bf16.msra.mxu0 %v1303
        %1324 = vmatprep.subr.bf16.mxu0 0
        %1325 = vmatpush1.bf16.msra.mxu0 %v1304
        %1326 = vmatprep.subr.bf16.mxu0 0
        %1327 = vmatpush1.bf16.msra.mxu0 %v1305
        %1328 = vmatprep.subr.bf16.mxu0 0
        %1329 = vmatpush1.bf16.msra.mxu0 %v1306
        %1330 = vmatprep.subr.bf16.mxu0 0
        %1331 = vmatpush1.bf16.msra.mxu0 %v1307
        %1332 = vmatprep.subr.bf16.mxu0 0
        %1333 = vmatpush1.bf16.msra.mxu0 0
        %1334 = vmatprep.subr.bf16.mxu0 0
        %1335 = vmatpush1.bf16.msra.mxu0 0
        %1336 = vmatprep.subr.bf16.mxu0 0
        %1337 = vmatpush1.bf16.msra.mxu0 0
        %1338 = vmatprep.subr.bf16.mxu0 0
        %1339 = vmatpush1.bf16.msra.mxu0 0
        %1340 = vmatprep.subr.bf16.mxu0 0
        %1341 = vmatpush1.bf16.msra.mxu0 0
        %1342 = vmatprep.subr.bf16.mxu0 0
        %1343 = vmatpush1.bf16.msra.mxu0 0
        %1344 = vmatprep.subr.bf16.mxu0 0
        %1345 = vmatpush1.bf16.msra.mxu0 0
        %1346 = vmatprep.subr.bf16.mxu0 0
        %1347 = vmatpush1.bf16.msra.mxu0 0
        %1348 = vmatprep.mubr.bf16.mxu0 0
        %1349 = vmatmul.mubr.bf16.gmra.mrb[0].mxu0 %v1237
        %v1350 = vpop.f32.mrb[0].mxu0
        %v1351 = vadd.f32 %v1266, %v1350
        %v1352 = vpop.f32.mrb[0].mxu0
        %v1353 = vpop.f32.mrb[0].mxu0
        %v1354 = vadd.f32 %v1266, %v1353
        %v1355 = vpop.f32.mrb[0].mxu0
        %1356 = vmatprep.mubr.bf16.mxu0 0
        %1357 = vmatmul.mubr.bf16.gmra.mrb[0].mxu0 %v1238
        %v1358 = vpop.f32.mrb[0].mxu0
        %v1359 = vadd.f32 %v1266, %v1358
        %v1360 = vpop.f32.mrb[0].mxu0
        %v1361 = vpop.f32.mrb[0].mxu0
        %v1362 = vadd.f32 %v1266, %v1361
        %v1363 = vpop.f32.mrb[0].mxu0
        %1364 = vmatprep.mubr.bf16.mxu0 0
        %1365 = vmatmul.mubr.bf16.gmra.mrb[0].mxu0 %v1239
        %v1366 = vpop.f32.mrb[0].mxu0
        %v1367 = vadd.f32 %v1266, %v1366
        %v1368 = vpop.f32.mrb[0].mxu0
        %v1369 = vpop.f32.mrb[0].mxu0
        %v1370 = vadd.f32 %v1266, %v1369
        %v1371 = vpop.f32.mrb[0].mxu0
        %1372 = vmatprep.mubr.bf16.mxu0 0
        %1373 = vmatmul.mubr.bf16.gmra.mrb[0].mxu0 %v1240
        %v1374 = vpop.f32.mrb[0].mxu0
        %v1375 = vadd.f32 %v1266, %v1374
        %v1376 = vpop.f32.mrb[0].mxu0
        %v1377 = vpop.f32.mrb[0].mxu0
        %v1378 = vadd.f32 %v1266, %v1377
        %v1379 = vpop.f32.mrb[0].mxu0
        %1380 = vmatprep.mubr.bf16.mxu0 0
        %1381 = vmatmul.mubr.bf16.gmra.mrb[0].mxu0 %v1241
        %v1382 = vpop.f32.mrb[0].mxu0
        %v1383 = vadd.f32 %v1266, %v1382
        %v1384 = vpop.f32.mrb[0].mxu0
        %v1385 = vpop.f32.mrb[0].mxu0
        %v1386 = vadd.f32 %v1266, %v1385
        %v1387 = vpop.f32.mrb[0].mxu0
        %1388 = vmatprep.mubr.bf16.mxu0 0
        %1389 = vmatmul.mubr.bf16.gmra.mrb[0].mxu0 %v1242
        %v1390 = vpop.f32.mrb[0].mxu0
        %v1391 = vadd.f32 %v1266, %v1390
        %v1392 = vpop.f32.mrb[0].mxu0
        %v1393 = vpop.f32.mrb[0].mxu0
        %v1394 = vadd.f32 %v1266, %v1393
        %v1395 = vpop.f32.mrb[0].mxu0
        %1396 = vmatprep.mubr.bf16.mxu0 0
        %1397 = vmatmul.mubr.bf16.gmra.mrb[0].mxu0 %v1243
        %v1398 = vpop.f32.mrb[0].mxu0
        %v1399 = vadd.f32 %v1266, %v1398
        %v1400 = vpop.f32.mrb[0].mxu0
        %v1401 = vpop.f32.mrb[0].mxu0
        %v1402 = vadd.f32 %v1266, %v1401
        %v1403 = vpop.f32.mrb[0].mxu0
        %1404 = vmatprep.mubr.bf16.mxu0 0
        %1405 = vmatmul.mubr.bf16.gmra.mrb[0].mxu0 %v1244
        %v1406 = vpop.f32.mrb[0].mxu0
        %v1407 = vadd.f32 %v1266, %v1406
        %v1408 = vpop.f32.mrb[0].mxu0
        %v1409 = vpop.f32.mrb[0].mxu0
        %v1410 = vadd.f32 %v1266, %v1409
        %v1411 = vpop.f32.mrb[0].mxu0
        %1412 = vdwg.mxu0
        %1413 = vst [vmem:[%s245] sm:$0xff] %v1351
        %1414 = vst [vmem:[%s245 + $0x8] sm:$0xff] %v1354
        %1415 = vst [vmem:[%s245 + $0x10] sm:$0xff] %v1359
        %1416 = vst [vmem:[%s245 + $0x18] sm:$0xff] %v1362
        %1417 = vst [vmem:[%s245 + $0x20] sm:$0xff] %v1367
        %1418 = vst [vmem:[%s245 + $0x28] sm:$0xff] %v1370
        %1419 = vst [vmem:[%s245 + $0x30] sm:$0xff] %v1375
        %1420 = vst [vmem:[%s245 + $0x38] sm:$0xff] %v1378
        %1421 = vst [vmem:[%s245 + $0x40] sm:$0xff] %v1383
        %1422 = vst [vmem:[%s245 + $0x48] sm:$0xff] %v1386
        %1423 = vst [vmem:[%s245 + $0x50] sm:$0xff] %v1391
        %1424 = vst [vmem:[%s245 + $0x58] sm:$0xff] %v1394
        %1425 = vst [vmem:[%s245 + $0x60] sm:$0xff] %v1399
        %1426 = vst [vmem:[%s245 + $0x68] sm:$0xff] %v1402
        %1427 = vst [vmem:[%s245 + $0x70] sm:$0xff] %v1407
        %1428 = vst [vmem:[%s245 + $0x78] sm:$0xff] %v1410
        %s1429 = sand.u32 %s159, 1
        %s1430 = scalar_lea.sflag [#allocation3], %s1429
        %s1431 = sand.u32 %s159, 1
        %s1432 = smul.addr %s1431, 128
        %s1433 = scalar_lea.vmem [#allocation2], %s1432
        // Predicated region
        $region45: #{apply.1} parent=43 // pred_check
          %p1434 = pneg %p169
        $region46: #{apply.1} parent=43 // pred_check_branch
          %1436 = sbr.rel (%p1434) target = $region48
        $region47: #{apply.1} parent=43 // pred_region
          %s1437 = smul.u32 16, %s20
          %s1439 = ssub.s32 2048, 2048
          %1440 = vsyncadd %s1430, %s1439
          %s1441 = smul.addr %s1437, 128
          %s1442 = scalar_lea.hbm %s6, %s1441
          %s1443 = sshll.u32 %s1433, 4
          %s1444 = int_to_ptr.vmem [resolvable:$true] %s1443
          %1449 = dma.vmem_to_hbm [thread:$0]  %s1444, 2048, %s1442, %s1430, 128, 128, 8
        $region48: #{apply.1} parent=43 // pred_fallthru
          _
      $region44: #{apply.1} parent=5 // pred_fallthru
        _
      %p1450 = scmp.le.s32.totalorder 2, %s15
      // Predicated region
      $region49: #{apply.1} parent=5 // pred_check
        %p1451 = pneg %p1450
      $region50: #{apply.1} parent=5 // pred_check_branch
        %1453 = sbr.rel (%p1451) target = $region52
      $region51: #{apply.1} parent=5 // pred_region
        %s1454 = ssub.s32 %s15, 2
        // Predicated region
        $region53: #{apply.1} parent=51 // pred_check
          %p1455 = pneg %p175
        $region54: #{apply.1} parent=51 // pred_check_branch
          %1457 = sbr.rel (%p1455) target = $region56
        $region55: #{apply.1} parent=51 // pred_region
          %s1458 = sand.u32 %s160, 1
          %s1459 = scalar_lea.sflag [#allocation3], %s1458
          %s1460 = sand.u32 %s160, 1
          %s1461 = smul.addr %s1460, 128
          %s1462 = scalar_lea.vmem [#allocation2], %s1461
          %1463 = dma.done %s1459, 2048
        $region56: #{apply.1} parent=51 // pred_fallthru
          _
      $region52: #{apply.1} parent=5 // pred_fallthru
        _
    $region6: #{apply.1} parent=1 // loop_footer
      %s19 = sadd.s32 1, %s15
    $region7: #{apply.1} parent=1 // loop_footer_branch
      %14 = sbr.rel target = $region3
    $region8: #{apply.1} parent=1 // loop_exit
      _
    %1464 = vsyncpa [#allocation3], 1
    %s1465 = scalar_lea.sflag [#allocation3], 1
    %1466 = vsyncpa %s1465, 1

</llo_original>
